<compile_context>
chip_gen: v6e
topology: v6e:2x2x1
jax: 0.10.0
libtpu: 0.0.40
codegen_flags: <defaults>
</compile_context>

<pallas_src>
import jax
import jax.numpy as jnp
from jax.experimental import pallas as pl
from jax.experimental.pallas import tpu as pltpu


# ---------------------------------------------------------------------------
# Empty module: pure pass-through (no kernel, zero bytes moved).
# ---------------------------------------------------------------------------
class EmptyPallas:
    """JAX equivalent of second.pytorch's Empty module."""

    def __init__(self, *args, **kwargs):
        del args, kwargs

    def __call__(self, *args, **kwargs):
        del kwargs
        if len(args) == 1:
            return args[0]
        elif len(args) == 0:
            return None
        return args  # tuple, exactly like the PyTorch module


# ---------------------------------------------------------------------------
# Optional Pallas identity-copy kernel (only if a fresh buffer is required).
# Single HBM->HBM DMA: no VMEM round trip, no grid, no tiling constraints.
# ---------------------------------------------------------------------------
def _hbm_copy_kernel(x_hbm, o_hbm, sem):
    cp = pltpu.make_async_copy(x_hbm, o_hbm, sem)
    cp.start()
    cp.wait()


def pallas_copy(x):
    """Fresh-buffer identity copy of `x` via one HBM->HBM Pallas DMA.

    Exactly one HBM read + one HBM write, on every TPU generation, for any
    shape/dtype — the DMA engines handle the layout; no VMEM staging needed.
    """
    x = jnp.asarray(x)
    if x.ndim == 0 or x.size == 0:
        # Degenerate shapes: nothing meaningful to DMA; hand back the array.
        return x

    return pl.pallas_call(
        _hbm_copy_kernel,
        out_shape=jax.ShapeDtypeStruct(x.shape, x.dtype),
        in_specs=[pl.BlockSpec(memory_space=pl.ANY)],    # raw HBM ref, no auto-DMA
        out_specs=pl.BlockSpec(memory_space=pl.ANY),     # raw HBM ref, no auto-DMA
        scratch_shapes=[pltpu.SemaphoreType.DMA(())],    # completion semaphore
    )(x)


if __name__ == "__main__":
    key = jax.random.PRNGKey(0)
    k1, k2, k3 = jax.random.split(key, 3)

    x = jax.random.normal(k1, (2, 4, 16, 16), dtype=jnp.float32)  # NCHW-style
    y = jax.random.normal(k2, (2, 8), dtype=jnp.float32)
    z = jax.random.normal(k3, (128, 256), dtype=jnp.bfloat16)     # lane-dense 2-D

    mod = EmptyPallas()

    # Case 1: single arg -> the very same array (zero-cost pass-through).
    out1 = mod(x)
    assert out1 is x

    # Case 2: no args -> None.
    assert mod() is None

    # Case 3: multiple args -> tuple of the same arrays.
    out3 = mod(x, y)
    assert isinstance(out3, tuple) and len(out3) == 2
    assert out3[0] is x and out3[1] is y

    # Optional Pallas fresh-buffer copy path (single HBM->HBM DMA).
    out_copy = pallas_copy(x)
    jax.block_until_ready(out_copy)
    assert out_copy.shape == x.shape and out_copy.dtype == x.dtype
    assert bool(jnp.all(out_copy == x))

    out_copy2 = pallas_copy(y)
    jax.block_until_ready(out_copy2)
    assert out_copy2.shape == y.shape and out_copy2.dtype == y.dtype
    assert bool(jnp.all(out_copy2 == y))

    out_copy3 = pallas_copy(z)
    jax.block_until_ready(out_copy3)
    assert out_copy3.shape == z.shape and out_copy3.dtype == z.dtype
    assert bool(jnp.all(out_copy3 == z))

    print("KERNEL_OK")
</pallas_src>

<mosaic_0001>
module attributes {stable_mosaic.version = 11 : i64} {
  func.func @_hbm_copy_kernel(%arg0: memref<2x4x16x16xf32, #tpu.memory_space<any>>, %arg1: memref<2x4x16x16xf32, #tpu.memory_space<any>>, %arg2: memref<!tpu.dma_semaphore, #tpu.memory_space<semaphore_mem>>) attributes {dimension_semantics = [], scalar_prefetch = 0 : i64, scratch_operands = 1 : i64, tpu.core_type = #tpu.core_type<tc>} {
    tpu.enqueue_dma source(%arg0 : memref<2x4x16x16xf32, #tpu.memory_space<any>>) target(%arg1 : memref<2x4x16x16xf32, #tpu.memory_space<any>>) target_semaphore(%arg2 : memref<!tpu.dma_semaphore, #tpu.memory_space<semaphore_mem>>)
    tpu.wait_dma2 semaphore(%arg2 : memref<!tpu.dma_semaphore, #tpu.memory_space<semaphore_mem>>) src(%arg0 : memref<2x4x16x16xf32, #tpu.memory_space<any>>) dst(%arg1 : memref<2x4x16x16xf32, #tpu.memory_space<any>>)
    return
  }
}

</mosaic_0001>

<llo_original>
// kernel: tpu_custom_call.1
$region0: #{tpu_custom_call.1}
  #allocation0 [shape = 'u32[]', space=smem, size = 0x4, offset = 0x4, fixed_abs, tag = 'smem constant byte address 0x4 - core index']
  #allocation1 [shape = 'u32[144,128]{1,0:T(1,128)}', space=vmem, size = 0x12000, scoped, tag = 'internal scratch']
  #allocation2 [shape = 's32[1]{0}', space=sflag, size = 0x4, scoped, tag = 'scratch operand']
  #allocation3 [shape = 's32[]', space=sflag, size = 0x4, offset = 0, fixed_abs, tag = 'sflag constant byte address 0x0 - dummy sync flag']
  #allocation4 [shape = 'u32[0]{0}', space=smem, size = 0, offset = 0, fixed_abs, tag = 'smem constant byte address 0x0 - null']
  %s0 = inlined_call_operand.hbm [shape: f32[2,4,16,16], index: 0, kind: input, shape index: {}]
  %s1 = inlined_call_operand.hbm [shape: f32[2,4,16,16], index: 1, kind: output, shape index: {}]
  %s2 = sld [smem:[#allocation0]]
  $region2: #{tpu_custom_call.1} parent=0
    _
  %s4 = ssub.s32 1, %s2
  %s5 = scalar_select 0, %s4, %s2
  %s7 = sshll.u32 1, 14
  %s8 = sxor.u32 4294967295, %s7
  %12 = dma.general %s0, 2048, %s1, [#allocation2], 131072, [#allocation4], 0, 0
  %s13 = smul.u32 2, 4
  %s14 = smul.u32 %s13, 16
  %s15 = smul.u32 %s14, 1
  %s16 = sshll.u32 %s15, 4
  %17 = dma.done [#allocation2], %s16
  %18 = vsyncmov [#allocation2]
  %s19 = vpop.sfrf %18
  %p20 = scmp.eq.s32.totalorder %s19, 0
  %p21 = pneg %p20
  %23 = shalt.err (%p21)

</llo_original>
